<compile_context>
chip_gen: v7x
topology: tpu7x:2x2x1
jax: 0.10.0
libtpu: 0.0.40
codegen_flags: <defaults>
</compile_context>

<pallas_src>
import jax
import jax.numpy as jnp
from jax.experimental import pallas as pl
from jax.experimental.pallas import tpu as pltpu

IN_DIM = 1024
HID_DIM = 64
OUT_DIM = 36
W2_PAD = 128          # lane-aligned width for the second matmul's RHS
MAX_TILE_B = 512      # mem-bound roofline ~85% at 512+ on v6e; tiny VMEM footprint


def mlp_kernel(x_ref, w1_ref, b1_ref, w2_ref, b2_ref, o_ref):
    # f32 -> bf16 cast on the VPU (hidden under the x DMA), then MXU matmul
    # with f32 accumulation: (TILE_B,1024)bf16 @ (1024,64)bf16 -> f32.
    x_bf16 = x_ref[...].astype(jnp.bfloat16)
    h = jnp.dot(x_bf16, w1_ref[...], preferred_element_type=jnp.float32)
    h = h + b1_ref[...]                                   # f32 bias add (VPU)
    # Exact sigmoid in f32 (exp + exact reciprocal on the EUP; free under DMA).
    h = pl.reciprocal(1.0 + jnp.exp(-h), approx=False)
    # fc_out: (TILE_B,64)f32 @ (64,128)f32 -> f32; only the first 36 columns
    # are real (w2 zero-padded at init), stored as a masked 36-lane write.
    out = jnp.dot(h, w2_ref[...], preferred_element_type=jnp.float32)
    o_ref[...] = (out[:, :OUT_DIM] + b2_ref[...]).astype(o_ref.dtype)


def net_forward(x, w1_t, b1, w2_pad, b2):
    """x: (B, 1024) f32. w1_t: (1024,64) bf16. b1: (1,64) f32.
    w2_pad: (64,128) f32 (zero-padded from (64,36)). b2: (1,36) f32.
    Returns (B, 36) f32."""
    B = x.shape[0]

    # Batch tile: multiple of 8 (sublane), capped at MAX_TILE_B.
    tile_b = max(8, min(MAX_TILE_B, pl.cdiv(B, 8) * 8))
    # Keep >= 2 grid steps when there is enough batch so both v7x TensorCores
    # get work (no-op on v5e/v6e; per-step overhead is negligible).
    if B >= 16 and pl.cdiv(B, tile_b) < 2:
        tile_b = max(8, pl.cdiv(pl.cdiv(B, 2), 8) * 8)
    grid = (pl.cdiv(B, tile_b),)   # partial tail block handled by Pallas masking

    return pl.pallas_call(
        mlp_kernel,
        out_shape=jax.ShapeDtypeStruct((B, OUT_DIM), jnp.float32),
        grid=grid,
        in_specs=[
            pl.BlockSpec((tile_b, IN_DIM), lambda i: (i, 0)),    # x: batch-tiled, f32
            pl.BlockSpec((IN_DIM, HID_DIM), lambda i: (0, 0)),   # w1 (bf16): resident
            pl.BlockSpec((1, HID_DIM), lambda i: (0, 0)),        # b1: resident
            pl.BlockSpec((HID_DIM, W2_PAD), lambda i: (0, 0)),   # w2 (padded): resident
            pl.BlockSpec((1, OUT_DIM), lambda i: (0, 0)),        # b2: resident
        ],
        out_specs=pl.BlockSpec((tile_b, OUT_DIM), lambda i: (i, 0)),
        compiler_params=pltpu.CompilerParams(
            dimension_semantics=("parallel",),
        ),
    )(x, w1_t, b1, w2_pad, b2)


def init_params(key):
    # Mimic nn.Linear's U(-1/sqrt(fan_in), 1/sqrt(fan_in)); weights stored
    # pre-transposed (in, out). w1 in bf16 (fed straight to the MXU).
    # w2 is padded to a lane-aligned (64,128) ONCE here (hoisted out of forward).
    k1, k2, k3, k4 = jax.random.split(key, 4)
    bound1 = 1.0 / jnp.sqrt(float(IN_DIM))
    bound2 = 1.0 / jnp.sqrt(float(HID_DIM))
    w1_t = jax.random.uniform(k1, (IN_DIM, HID_DIM), jnp.float32,
                              -bound1, bound1).astype(jnp.bfloat16)
    b1 = jax.random.uniform(k2, (1, HID_DIM), jnp.float32, -bound1, bound1)
    w2_t = jax.random.uniform(k3, (HID_DIM, OUT_DIM), jnp.float32, -bound2, bound2)
    b2 = jax.random.uniform(k4, (1, OUT_DIM), jnp.float32, -bound2, bound2)
    w2_pad = jnp.pad(w2_t, ((0, 0), (0, W2_PAD - OUT_DIM)))
    return w1_t, b1, w2_pad, b2


def reference(x, w1_t, b1, w2_pad, b2):
    # Same bf16 inputs / f32 accumulation as the kernel for a fair check.
    h = jnp.dot(x.astype(jnp.bfloat16), w1_t, preferred_element_type=jnp.float32)
    h = jax.nn.sigmoid(h + b1)
    return jnp.dot(h, w2_pad[:, :OUT_DIM], preferred_element_type=jnp.float32) + b2


if __name__ == "__main__":
    key = jax.random.PRNGKey(0)
    kp, kx = jax.random.split(key)
    w1_t, b1, w2_pad, b2 = init_params(kp)

    B = 8  # small batch for the smoke test (kernel tiles any B, tail masked)
    x = jax.random.normal(kx, (B, IN_DIM), jnp.float32)

    out = net_forward(x, w1_t, b1, w2_pad, b2)
    out = jax.block_until_ready(out)

    ref = reference(x, w1_t, b1, w2_pad, b2)
    assert out.shape == (B, OUT_DIM)
    assert jnp.allclose(out, ref, atol=1e-2, rtol=1e-2)
    print("KERNEL_OK")
</pallas_src>

<mosaic_0001>
module attributes {stable_mosaic.version = 11 : i64} {
  func.func @mlp_kernel(%arg0: i32, %arg1: memref<8x1024xf32, #tpu.memory_space<vmem>>, %arg2: memref<1024x64xbf16, #tpu.memory_space<vmem>>, %arg3: memref<1x64xf32, #tpu.memory_space<vmem>>, %arg4: memref<64x128xf32, #tpu.memory_space<vmem>>, %arg5: memref<1x36xf32, #tpu.memory_space<vmem>>, %arg6: memref<8x36xf32, #tpu.memory_space<vmem>>) attributes {dimension_semantics = [#tpu.dimension_semantics<parallel>], iteration_bounds = array<i64: 1>, scalar_prefetch = 0 : i64, scratch_operands = 0 : i64, tpu.core_type = #tpu.core_type<tc>, window_params = [{transform_indices = @transform_0, window_bounds = array<i64: 8, 1024>}, {pipeline_mode = #tpu.pipeline_mode<synchronous>, transform_indices = @transform_1, window_bounds = array<i64: 1024, 64>}, {pipeline_mode = #tpu.pipeline_mode<synchronous>, transform_indices = @transform_2, window_bounds = array<i64: 1, 64>}, {pipeline_mode = #tpu.pipeline_mode<synchronous>, transform_indices = @transform_3, window_bounds = array<i64: 64, 128>}, {pipeline_mode = #tpu.pipeline_mode<synchronous>, transform_indices = @transform_4, window_bounds = array<i64: 1, 36>}, {transform_indices = @transform_5, window_bounds = array<i64: 8, 36>}]} {
    %c0 = arith.constant 0 : index
    %c0_0 = arith.constant 0 : index
    %0 = vector.load %arg1[%c0, %c0_0] : memref<8x1024xf32, #tpu.memory_space<vmem>>, vector<8x1024xf32>
    %1 = arith.truncf %0 : vector<8x1024xf32> to vector<8x1024xbf16>
    %c0_1 = arith.constant 0 : index
    %c0_2 = arith.constant 0 : index
    %2 = vector.load %arg2[%c0_1, %c0_2] : memref<1024x64xbf16, #tpu.memory_space<vmem>>, vector<1024x64xbf16>
    %cst = arith.constant dense<0.000000e+00> : vector<8x64xf32>
    %3 = tpu.matmul %1, %2, %cst {dimension_numbers = #tpu.dot_dimension_numbers<[1], [0], [0], [1], [0, 0, 1, 1], [], []>} : vector<8x1024xbf16>, vector<1024x64xbf16>, vector<8x64xf32> -> vector<8x64xf32>
    %c0_3 = arith.constant 0 : index
    %c0_4 = arith.constant 0 : index
    %4 = vector.load %arg3[%c0_3, %c0_4] : memref<1x64xf32, #tpu.memory_space<vmem>>, vector<1x64xf32>
    %5 = vector.broadcast %4 : vector<1x64xf32> to vector<8x64xf32>
    %6 = arith.addf %3, %5 : vector<8x64xf32>
    %cst_5 = arith.constant 0.000000e+00 : f32
    %7 = vector.broadcast %cst_5 : f32 to vector<8x64xf32>
    %8 = arith.subf %7, %6 : vector<8x64xf32>
    %9 = math.exp %8 : vector<8x64xf32>
    %cst_6 = arith.constant 1.000000e+00 : f32
    %10 = vector.broadcast %cst_6 : f32 to vector<8x64xf32>
    %11 = arith.addf %10, %9 : vector<8x64xf32>
    %12 = tpu.reciprocal %11 : vector<8x64xf32> -> vector<8x64xf32>
    %c0_7 = arith.constant 0 : index
    %c0_8 = arith.constant 0 : index
    %13 = vector.load %arg4[%c0_7, %c0_8] : memref<64x128xf32, #tpu.memory_space<vmem>>, vector<64x128xf32>
    %cst_9 = arith.constant dense<0.000000e+00> : vector<8x128xf32>
    %14 = tpu.matmul %12, %13, %cst_9 {dimension_numbers = #tpu.dot_dimension_numbers<[1], [0], [0], [1], [0, 0, 1, 1], [], []>} : vector<8x64xf32>, vector<64x128xf32>, vector<8x128xf32> -> vector<8x128xf32>
    %15 = vector.extract_strided_slice %14 {offsets = [0, 0], sizes = [8, 36], strides = [1, 1]} : vector<8x128xf32> to vector<8x36xf32>
    %c0_10 = arith.constant 0 : index
    %c0_11 = arith.constant 0 : index
    %16 = vector.load %arg5[%c0_10, %c0_11] : memref<1x36xf32, #tpu.memory_space<vmem>>, vector<1x36xf32>
    %17 = vector.broadcast %16 : vector<1x36xf32> to vector<8x36xf32>
    %18 = arith.addf %15, %17 : vector<8x36xf32>
    %c0_12 = arith.constant 0 : index
    %c0_13 = arith.constant 0 : index
    %19 = vector.load %arg6[%c0_12, %c0_13] : memref<8x36xf32, #tpu.memory_space<vmem>>, vector<8x36xf32>
    tpu.vector_store %arg6[%c0_12, %c0_13], %18 {strides = array<i32>} : memref<8x36xf32, #tpu.memory_space<vmem>>, vector<8x36xf32>,
    return
  }
  func.func @transform_0(%arg0: i32) -> (i32, i32) {
    %c0_i32 = arith.constant 0 : i32
    %c0_i32_0 = arith.constant 0 : i32
    return %arg0, %c0_i32 : i32, i32
  }
  func.func @transform_1(%arg0: i32) -> (i32, i32) {
    %c0_i32 = arith.constant 0 : i32
    %c0_i32_0 = arith.constant 0 : i32
    %c0_i32_1 = arith.constant 0 : i32
    return %c0_i32, %c0_i32_0 : i32, i32
  }
  func.func @transform_2(%arg0: i32) -> (i32, i32) {
    %c0_i32 = arith.constant 0 : i32
    %c0_i32_0 = arith.constant 0 : i32
    %c0_i32_1 = arith.constant 0 : i32
    return %c0_i32, %c0_i32_0 : i32, i32
  }
  func.func @transform_3(%arg0: i32) -> (i32, i32) {
    %c0_i32 = arith.constant 0 : i32
    %c0_i32_0 = arith.constant 0 : i32
    %c0_i32_1 = arith.constant 0 : i32
    return %c0_i32, %c0_i32_0 : i32, i32
  }
  func.func @transform_4(%arg0: i32) -> (i32, i32) {
    %c0_i32 = arith.constant 0 : i32
    %c0_i32_0 = arith.constant 0 : i32
    %c0_i32_1 = arith.constant 0 : i32
    return %c0_i32, %c0_i32_0 : i32, i32
  }
  func.func @transform_5(%arg0: i32) -> (i32, i32) {
    %c0_i32 = arith.constant 0 : i32
    %c0_i32_0 = arith.constant 0 : i32
    return %arg0, %c0_i32 : i32, i32
  }
}

</mosaic_0001>

<llo_original>
// kernel: tpu_custom_call.1
$region0: #{tpu_custom_call.1}
  #allocation0 [shape = 'u32[]', space=smem, size = 0x4, offset = 0x4, fixed_abs, tag = 'smem constant byte address 0x4 - core index']
  #allocation1 [shape = 'u32[144,128]{1,0:T(1,128)}', space=vmem, size = 0x12000, scoped, tag = 'internal scratch']
  %s0 = inlined_call_operand.vmem [shape: f32[8,1024], index: 0, kind: input, shape index: {}]
  %s1 = inlined_call_operand.vmem [shape: bf16[1024,64], index: 1, kind: input, shape index: {}]
  %s2 = inlined_call_operand.vmem [shape: f32[1,64], index: 2, kind: input, shape index: {}]
  %s3 = inlined_call_operand.vmem [shape: f32[64,128], index: 3, kind: input, shape index: {}]
  %s4 = inlined_call_operand.vmem [shape: f32[1,36], index: 4, kind: input, shape index: {}]
  %s5 = inlined_call_operand.hbm [shape: f32[8,36], index: 5, kind: output, shape index: {}]
  %s6 = sld [smem:[#allocation0]]
  $region30: #{tpu_custom_call.1} parent=0
    _
  %s8 = ssub.s32 1, %s6
  %s9 = scalar_select 0, %s8, %s6
  $region1: #{tpu_custom_call.1} parent=0
    #allocation2 [shape = 'u8[4096]{0}', space=vmem, size = 0x1000, scoped, tag = 'output window, operand 0, single buffered']
    #allocation3 [shape = 's32[1]{0}', space=sflag, size = 0x4, scoped, tag = 'scoped memory for tpu_custom_call.1']
    %10 = vsyncpa [#allocation3], 0
    // Predicated region
    $region2: #{tpu_custom_call.1} parent=1 // pred_check
      _
    $region3: #{tpu_custom_call.1} parent=1 // pred_check_branch
      %12 = sbr.rel (0) target = $region5
    $region4: #{tpu_custom_call.1} parent=1 // pred_region
      _
    $region5: #{tpu_custom_call.1} parent=1 // pred_fallthru
      _
    // Predicated region
    $region6: #{tpu_custom_call.1} parent=1 // pred_check
      _
    $region7: #{tpu_custom_call.1} parent=1 // pred_check_branch
      %14 = sbr.rel (0) target = $region9
    $region8: #{tpu_custom_call.1} parent=1 // pred_region
      _
    $region9: #{tpu_custom_call.1} parent=1 // pred_fallthru
      _
    // Predicated region
    $region10: #{tpu_custom_call.1} parent=1 // pred_check
      _
    $region11: #{tpu_custom_call.1} parent=1 // pred_check_branch
      %16 = sbr.rel (0) target = $region13
    $region12: #{tpu_custom_call.1} parent=1 // pred_region
      _
    $region13: #{tpu_custom_call.1} parent=1 // pred_fallthru
      _
    // Predicated region
    $region14: #{tpu_custom_call.1} parent=1 // pred_check
      _
    $region15: #{tpu_custom_call.1} parent=1 // pred_check_branch
      %18 = sbr.rel (0) target = $region17
    $region16: #{tpu_custom_call.1} parent=1 // pred_region
      _
    $region17: #{tpu_custom_call.1} parent=1 // pred_fallthru
      _
    // Predicated region
    $region18: #{tpu_custom_call.1} parent=1 // pred_check
      _
    $region19: #{tpu_custom_call.1} parent=1 // pred_check_branch
      %20 = sbr.rel (0) target = $region21
    $region20: #{tpu_custom_call.1} parent=1 // pred_region
      _
    $region21: #{tpu_custom_call.1} parent=1 // pred_fallthru
      _
    %v22 = vld [vmem:[%s0] sm:$0xff]
    %v23 = vld [vmem:[%s0 + $0x8] sm:$0xff]
    %v24 = vld [vmem:[%s0 + $0x10] sm:$0xff]
    %v25 = vld [vmem:[%s0 + $0x18] sm:$0xff]
    %v26 = vld [vmem:[%s0 + $0x20] sm:$0xff]
    %v27 = vld [vmem:[%s0 + $0x28] sm:$0xff]
    %v28 = vld [vmem:[%s0 + $0x30] sm:$0xff]
    %v29 = vld [vmem:[%s0 + $0x38] sm:$0xff]
    %v30 = vpack.c.bf16 %v22, %v22
    %v31 = vpack.c.bf16 %v23, %v23
    %v32 = vpack.c.bf16 %v24, %v24
    %v33 = vpack.c.bf16 %v25, %v25
    %v34 = vpack.c.bf16 %v26, %v26
    %v35 = vpack.c.bf16 %v27, %v27
    %v36 = vpack.c.bf16 %v28, %v28
    %v37 = vpack.c.bf16 %v29, %v29
    %v38 = vld [vmem:[%s1] sm:$0xf]
    %v39 = vld [vmem:[%s1 + $0x4] sm:$0xf]
    %v40 = vld [vmem:[%s1 + $0x8] sm:$0xf]
    %v41 = vld [vmem:[%s1 + $0xc] sm:$0xf]
    %v42 = vld [vmem:[%s1 + $0x10] sm:$0xf]
    %v43 = vld [vmem:[%s1 + $0x14] sm:$0xf]
    %v44 = vld [vmem:[%s1 + $0x18] sm:$0xf]
    %v45 = vld [vmem:[%s1 + $0x1c] sm:$0xf]
    %v46 = vld [vmem:[%s1 + $0x20] sm:$0xf]
    %v47 = vld [vmem:[%s1 + $0x24] sm:$0xf]
    %v48 = vld [vmem:[%s1 + $0x28] sm:$0xf]
    %v49 = vld [vmem:[%s1 + $0x2c] sm:$0xf]
    %v50 = vld [vmem:[%s1 + $0x30] sm:$0xf]
    %v51 = vld [vmem:[%s1 + $0x34] sm:$0xf]
    %v52 = vld [vmem:[%s1 + $0x38] sm:$0xf]
    %v53 = vld [vmem:[%s1 + $0x3c] sm:$0xf]
    %v54 = vld [vmem:[%s1 + $0x40] sm:$0xf]
    %v55 = vld [vmem:[%s1 + $0x44] sm:$0xf]
    %v56 = vld [vmem:[%s1 + $0x48] sm:$0xf]
    %v57 = vld [vmem:[%s1 + $0x4c] sm:$0xf]
    %v58 = vld [vmem:[%s1 + $0x50] sm:$0xf]
    %v59 = vld [vmem:[%s1 + $0x54] sm:$0xf]
    %v60 = vld [vmem:[%s1 + $0x58] sm:$0xf]
    %v61 = vld [vmem:[%s1 + $0x5c] sm:$0xf]
    %v62 = vld [vmem:[%s1 + $0x60] sm:$0xf]
    %v63 = vld [vmem:[%s1 + $0x64] sm:$0xf]
    %v64 = vld [vmem:[%s1 + $0x68] sm:$0xf]
    %v65 = vld [vmem:[%s1 + $0x6c] sm:$0xf]
    %v66 = vld [vmem:[%s1 + $0x70] sm:$0xf]
    %v67 = vld [vmem:[%s1 + $0x74] sm:$0xf]
    %v68 = vld [vmem:[%s1 + $0x78] sm:$0xf]
    %v69 = vld [vmem:[%s1 + $0x7c] sm:$0xf]
    %v70 = vld [vmem:[%s1 + $0x80] sm:$0xf]
    %v71 = vld [vmem:[%s1 + $0x84] sm:$0xf]
    %v72 = vld [vmem:[%s1 + $0x88] sm:$0xf]
    %v73 = vld [vmem:[%s1 + $0x8c] sm:$0xf]
    %v74 = vld [vmem:[%s1 + $0x90] sm:$0xf]
    %v75 = vld [vmem:[%s1 + $0x94] sm:$0xf]
    %v76 = vld [vmem:[%s1 + $0x98] sm:$0xf]
    %v77 = vld [vmem:[%s1 + $0x9c] sm:$0xf]
    %v78 = vld [vmem:[%s1 + $0xa0] sm:$0xf]
    %v79 = vld [vmem:[%s1 + $0xa4] sm:$0xf]
    %v80 = vld [vmem:[%s1 + $0xa8] sm:$0xf]
    %v81 = vld [vmem:[%s1 + $0xac] sm:$0xf]
    %v82 = vld [vmem:[%s1 + $0xb0] sm:$0xf]
    %v83 = vld [vmem:[%s1 + $0xb4] sm:$0xf]
    %v84 = vld [vmem:[%s1 + $0xb8] sm:$0xf]
    %v85 = vld [vmem:[%s1 + $0xbc] sm:$0xf]
    %v86 = vld [vmem:[%s1 + $0xc0] sm:$0xf]
    %v87 = vld [vmem:[%s1 + $0xc4] sm:$0xf]
    %v88 = vld [vmem:[%s1 + $0xc8] sm:$0xf]
    %v89 = vld [vmem:[%s1 + $0xcc] sm:$0xf]
    %v90 = vld [vmem:[%s1 + $0xd0] sm:$0xf]
    %v91 = vld [vmem:[%s1 + $0xd4] sm:$0xf]
    %v92 = vld [vmem:[%s1 + $0xd8] sm:$0xf]
    %v93 = vld [vmem:[%s1 + $0xdc] sm:$0xf]
    %v94 = vld [vmem:[%s1 + $0xe0] sm:$0xf]
    %v95 = vld [vmem:[%s1 + $0xe4] sm:$0xf]
    %v96 = vld [vmem:[%s1 + $0xe8] sm:$0xf]
    %v97 = vld [vmem:[%s1 + $0xec] sm:$0xf]
    %v98 = vld [vmem:[%s1 + $0xf0] sm:$0xf]
    %v99 = vld [vmem:[%s1 + $0xf4] sm:$0xf]
    %v100 = vld [vmem:[%s1 + $0xf8] sm:$0xf]
    %v101 = vld [vmem:[%s1 + $0xfc] sm:$0xf]
    %v102 = vld [vmem:[%s1 + $0x100] sm:$0xf]
    %v103 = vld [vmem:[%s1 + $0x104] sm:$0xf]
    %v104 = vld [vmem:[%s1 + $0x108] sm:$0xf]
    %v105 = vld [vmem:[%s1 + $0x10c] sm:$0xf]
    %v106 = vld [vmem:[%s1 + $0x110] sm:$0xf]
    %v107 = vld [vmem:[%s1 + $0x114] sm:$0xf]
    %v108 = vld [vmem:[%s1 + $0x118] sm:$0xf]
    %v109 = vld [vmem:[%s1 + $0x11c] sm:$0xf]
    %v110 = vld [vmem:[%s1 + $0x120] sm:$0xf]
    %v111 = vld [vmem:[%s1 + $0x124] sm:$0xf]
    %v112 = vld [vmem:[%s1 + $0x128] sm:$0xf]
    %v113 = vld [vmem:[%s1 + $0x12c] sm:$0xf]
    %v114 = vld [vmem:[%s1 + $0x130] sm:$0xf]
    %v115 = vld [vmem:[%s1 + $0x134] sm:$0xf]
    %v116 = vld [vmem:[%s1 + $0x138] sm:$0xf]
    %v117 = vld [vmem:[%s1 + $0x13c] sm:$0xf]
    %v118 = vld [vmem:[%s1 + $0x140] sm:$0xf]
    %v119 = vld [vmem:[%s1 + $0x144] sm:$0xf]
    %v120 = vld [vmem:[%s1 + $0x148] sm:$0xf]
    %v121 = vld [vmem:[%s1 + $0x14c] sm:$0xf]
    %v122 = vld [vmem:[%s1 + $0x150] sm:$0xf]
    %v123 = vld [vmem:[%s1 + $0x154] sm:$0xf]
    %v124 = vld [vmem:[%s1 + $0x158] sm:$0xf]
    %v125 = vld [vmem:[%s1 + $0x15c] sm:$0xf]
    %v126 = vld [vmem:[%s1 + $0x160] sm:$0xf]
    %v127 = vld [vmem:[%s1 + $0x164] sm:$0xf]
    %v128 = vld [vmem:[%s1 + $0x168] sm:$0xf]
    %v129 = vld [vmem:[%s1 + $0x16c] sm:$0xf]
    %v130 = vld [vmem:[%s1 + $0x170] sm:$0xf]
    %v131 = vld [vmem:[%s1 + $0x174] sm:$0xf]
    %v132 = vld [vmem:[%s1 + $0x178] sm:$0xf]
    %v133 = vld [vmem:[%s1 + $0x17c] sm:$0xf]
    %v134 = vld [vmem:[%s1 + $0x180] sm:$0xf]
    %v135 = vld [vmem:[%s1 + $0x184] sm:$0xf]
    %v136 = vld [vmem:[%s1 + $0x188] sm:$0xf]
    %v137 = vld [vmem:[%s1 + $0x18c] sm:$0xf]
    %v138 = vld [vmem:[%s1 + $0x190] sm:$0xf]
    %v139 = vld [vmem:[%s1 + $0x194] sm:$0xf]
    %v140 = vld [vmem:[%s1 + $0x198] sm:$0xf]
    %v141 = vld [vmem:[%s1 + $0x19c] sm:$0xf]
    %v142 = vld [vmem:[%s1 + $0x1a0] sm:$0xf]
    %v143 = vld [vmem:[%s1 + $0x1a4] sm:$0xf]
    %v144 = vld [vmem:[%s1 + $0x1a8] sm:$0xf]
    %v145 = vld [vmem:[%s1 + $0x1ac] sm:$0xf]
    %v146 = vld [vmem:[%s1 + $0x1b0] sm:$0xf]
    %v147 = vld [vmem:[%s1 + $0x1b4] sm:$0xf]
    %v148 = vld [vmem:[%s1 + $0x1b8] sm:$0xf]
    %v149 = vld [vmem:[%s1 + $0x1bc] sm:$0xf]
    %v150 = vld [vmem:[%s1 + $0x1c0] sm:$0xf]
    %v151 = vld [vmem:[%s1 + $0x1c4] sm:$0xf]
    %v152 = vld [vmem:[%s1 + $0x1c8] sm:$0xf]
    %v153 = vld [vmem:[%s1 + $0x1cc] sm:$0xf]
    %v154 = vld [vmem:[%s1 + $0x1d0] sm:$0xf]
    %v155 = vld [vmem:[%s1 + $0x1d4] sm:$0xf]
    %v156 = vld [vmem:[%s1 + $0x1d8] sm:$0xf]
    %v157 = vld [vmem:[%s1 + $0x1dc] sm:$0xf]
    %v158 = vld [vmem:[%s1 + $0x1e0] sm:$0xf]
    %v159 = vld [vmem:[%s1 + $0x1e4] sm:$0xf]
    %v160 = vld [vmem:[%s1 + $0x1e8] sm:$0xf]
    %v161 = vld [vmem:[%s1 + $0x1ec] sm:$0xf]
    %v162 = vld [vmem:[%s1 + $0x1f0] sm:$0xf]
    %v163 = vld [vmem:[%s1 + $0x1f4] sm:$0xf]
    %v164 = vld [vmem:[%s1 + $0x1f8] sm:$0xf]
    %v165 = vld [vmem:[%s1 + $0x1fc] sm:$0xf]
    %v166 = vld [vmem:[%s2] sm:$0x1]
    %v168 = vlaneseq
    %v169 = vshrl.u32 %v168, 7
    %v170 = vsub.s32 0, %v169
    %v171 = vrot.slane %v166, %v170
    %v301 = vunpack.c.l.b16 %v38
    %v302 = vunpack.c.l.b16 %v39
    %v303 = vunpack.c.l.b16 %v40
    %v304 = vunpack.c.l.b16 %v41
    %v305 = vunpack.c.l.b16 %v42
    %v306 = vunpack.c.l.b16 %v43
    %v307 = vunpack.c.l.b16 %v44
    %v308 = vunpack.c.l.b16 %v45
    %v309 = vunpack.c.l.b16 %v46
    %v310 = vunpack.c.l.b16 %v47
    %v311 = vunpack.c.l.b16 %v48
    %v312 = vunpack.c.l.b16 %v49
    %v313 = vunpack.c.l.b16 %v50
    %v314 = vunpack.c.l.b16 %v51
    %v315 = vunpack.c.l.b16 %v52
    %v316 = vunpack.c.l.b16 %v53
    %v317 = vunpack.c.l.b16 %v54
    %v318 = vunpack.c.l.b16 %v55
    %v319 = vunpack.c.l.b16 %v56
    %v320 = vunpack.c.l.b16 %v57
    %v321 = vunpack.c.l.b16 %v58
    %v322 = vunpack.c.l.b16 %v59
    %v323 = vunpack.c.l.b16 %v60
    %v324 = vunpack.c.l.b16 %v61
    %v325 = vunpack.c.l.b16 %v62
    %v326 = vunpack.c.l.b16 %v63
    %v327 = vunpack.c.l.b16 %v64
    %v328 = vunpack.c.l.b16 %v65
    %v329 = vunpack.c.l.b16 %v66
    %v330 = vunpack.c.l.b16 %v67
    %v331 = vunpack.c.l.b16 %v68
    %v332 = vunpack.c.l.b16 %v69
    %v333 = vunpack.c.l.b16 %v70
    %v334 = vunpack.c.l.b16 %v71
    %v335 = vunpack.c.l.b16 %v72
    %v336 = vunpack.c.l.b16 %v73
    %v337 = vunpack.c.l.b16 %v74
    %v338 = vunpack.c.l.b16 %v75
    %v339 = vunpack.c.l.b16 %v76
    %v340 = vunpack.c.l.b16 %v77
    %v341 = vunpack.c.l.b16 %v78
    %v342 = vunpack.c.l.b16 %v79
    %v343 = vunpack.c.l.b16 %v80
    %v344 = vunpack.c.l.b16 %v81
    %v345 = vunpack.c.l.b16 %v82
    %v346 = vunpack.c.l.b16 %v83
    %v347 = vunpack.c.l.b16 %v84
    %v348 = vunpack.c.l.b16 %v85
    %v349 = vunpack.c.l.b16 %v86
    %v350 = vunpack.c.l.b16 %v87
    %v351 = vunpack.c.l.b16 %v88
    %v352 = vunpack.c.l.b16 %v89
    %v353 = vunpack.c.l.b16 %v90
    %v354 = vunpack.c.l.b16 %v91
    %v355 = vunpack.c.l.b16 %v92
    %v356 = vunpack.c.l.b16 %v93
    %v357 = vunpack.c.l.b16 %v94
    %v358 = vunpack.c.l.b16 %v95
    %v359 = vunpack.c.l.b16 %v96
    %v360 = vunpack.c.l.b16 %v97
    %v361 = vunpack.c.l.b16 %v98
    %v362 = vunpack.c.l.b16 %v99
    %v363 = vunpack.c.l.b16 %v100
    %v364 = vunpack.c.l.b16 %v101
    %v365 = vunpack.c.l.b16 %v102
    %v366 = vunpack.c.l.b16 %v103
    %v367 = vunpack.c.l.b16 %v104
    %v368 = vunpack.c.l.b16 %v105
    %v369 = vunpack.c.l.b16 %v106
    %v370 = vunpack.c.l.b16 %v107
    %v371 = vunpack.c.l.b16 %v108
    %v372 = vunpack.c.l.b16 %v109
    %v373 = vunpack.c.l.b16 %v110
    %v374 = vunpack.c.l.b16 %v111
    %v375 = vunpack.c.l.b16 %v112
    %v376 = vunpack.c.l.b16 %v113
    %v377 = vunpack.c.l.b16 %v114
    %v378 = vunpack.c.l.b16 %v115
    %v379 = vunpack.c.l.b16 %v116
    %v380 = vunpack.c.l.b16 %v117
    %v381 = vunpack.c.l.b16 %v118
    %v382 = vunpack.c.l.b16 %v119
    %v383 = vunpack.c.l.b16 %v120
    %v384 = vunpack.c.l.b16 %v121
    %v385 = vunpack.c.l.b16 %v122
    %v386 = vunpack.c.l.b16 %v123
    %v387 = vunpack.c.l.b16 %v124
    %v388 = vunpack.c.l.b16 %v125
    %v389 = vunpack.c.l.b16 %v126
    %v390 = vunpack.c.l.b16 %v127
    %v391 = vunpack.c.l.b16 %v128
    %v392 = vunpack.c.l.b16 %v129
    %v393 = vunpack.c.l.b16 %v130
    %v394 = vunpack.c.l.b16 %v131
    %v395 = vunpack.c.l.b16 %v132
    %v396 = vunpack.c.l.b16 %v133
    %v397 = vunpack.c.l.b16 %v134
    %v398 = vunpack.c.l.b16 %v135
    %v399 = vunpack.c.l.b16 %v136
    %v400 = vunpack.c.l.b16 %v137
    %v401 = vunpack.c.l.b16 %v138
    %v402 = vunpack.c.l.b16 %v139
    %v403 = vunpack.c.l.b16 %v140
    %v404 = vunpack.c.l.b16 %v141
    %v405 = vunpack.c.l.b16 %v142
    %v406 = vunpack.c.l.b16 %v143
    %v407 = vunpack.c.l.b16 %v144
    %v408 = vunpack.c.l.b16 %v145
    %v409 = vunpack.c.l.b16 %v146
    %v410 = vunpack.c.l.b16 %v147
    %v411 = vunpack.c.l.b16 %v148
    %v412 = vunpack.c.l.b16 %v149
    %v413 = vunpack.c.l.b16 %v150
    %v414 = vunpack.c.l.b16 %v151
    %v415 = vunpack.c.l.b16 %v152
    %v416 = vunpack.c.l.b16 %v153
    %v417 = vunpack.c.l.b16 %v154
    %v418 = vunpack.c.l.b16 %v155
    %v419 = vunpack.c.l.b16 %v156
    %v420 = vunpack.c.l.b16 %v157
    %v421 = vunpack.c.l.b16 %v158
    %v422 = vunpack.c.l.b16 %v159
    %v423 = vunpack.c.l.b16 %v160
    %v424 = vunpack.c.l.b16 %v161
    %v425 = vunpack.c.l.b16 %v162
    %v426 = vunpack.c.l.b16 %v163
    %v427 = vunpack.c.l.b16 %v164
    %v428 = vunpack.c.l.b16 %v165
    %v429 = vpack.c.b16 %v302, %v301
    %v430 = vpack.c.b16 %v304, %v303
    %v431 = vpack.c.b16 %v306, %v305
    %v432 = vpack.c.b16 %v308, %v307
    %v433 = vpack.c.b16 %v310, %v309
    %v434 = vpack.c.b16 %v312, %v311
    %v435 = vpack.c.b16 %v314, %v313
    %v436 = vpack.c.b16 %v316, %v315
    %v437 = vpack.c.b16 %v318, %v317
    %v438 = vpack.c.b16 %v320, %v319
    %v439 = vpack.c.b16 %v322, %v321
    %v440 = vpack.c.b16 %v324, %v323
    %v441 = vpack.c.b16 %v326, %v325
    %v442 = vpack.c.b16 %v328, %v327
    %v443 = vpack.c.b16 %v330, %v329
    %v444 = vpack.c.b16 %v332, %v331
    %v445 = vpack.c.b16 %v334, %v333
    %v446 = vpack.c.b16 %v336, %v335
    %v447 = vpack.c.b16 %v338, %v337
    %v448 = vpack.c.b16 %v340, %v339
    %v449 = vpack.c.b16 %v342, %v341
    %v450 = vpack.c.b16 %v344, %v343
    %v451 = vpack.c.b16 %v346, %v345
    %v452 = vpack.c.b16 %v348, %v347
    %v453 = vpack.c.b16 %v350, %v349
    %v454 = vpack.c.b16 %v352, %v351
    %v455 = vpack.c.b16 %v354, %v353
    %v456 = vpack.c.b16 %v356, %v355
    %v457 = vpack.c.b16 %v358, %v357
    %v458 = vpack.c.b16 %v360, %v359
    %v459 = vpack.c.b16 %v362, %v361
    %v460 = vpack.c.b16 %v364, %v363
    %v461 = vpack.c.b16 %v366, %v365
    %v462 = vpack.c.b16 %v368, %v367
    %v463 = vpack.c.b16 %v370, %v369
    %v464 = vpack.c.b16 %v372, %v371
    %v465 = vpack.c.b16 %v374, %v373
    %v466 = vpack.c.b16 %v376, %v375
    %v467 = vpack.c.b16 %v378, %v377
    %v468 = vpack.c.b16 %v380, %v379
    %v469 = vpack.c.b16 %v382, %v381
    %v470 = vpack.c.b16 %v384, %v383
    %v471 = vpack.c.b16 %v386, %v385
    %v472 = vpack.c.b16 %v388, %v387
    %v473 = vpack.c.b16 %v390, %v389
    %v474 = vpack.c.b16 %v392, %v391
    %v475 = vpack.c.b16 %v394, %v393
    %v476 = vpack.c.b16 %v396, %v395
    %v477 = vpack.c.b16 %v398, %v397
    %v478 = vpack.c.b16 %v400, %v399
    %v479 = vpack.c.b16 %v402, %v401
    %v480 = vpack.c.b16 %v404, %v403
    %v481 = vpack.c.b16 %v406, %v405
    %v482 = vpack.c.b16 %v408, %v407
    %v483 = vpack.c.b16 %v410, %v409
    %v484 = vpack.c.b16 %v412, %v411
    %v485 = vpack.c.b16 %v414, %v413
    %v486 = vpack.c.b16 %v416, %v415
    %v487 = vpack.c.b16 %v418, %v417
    %v488 = vpack.c.b16 %v420, %v419
    %v489 = vpack.c.b16 %v422, %v421
    %v490 = vpack.c.b16 %v424, %v423
    %v491 = vpack.c.b16 %v426, %v425
    %v492 = vpack.c.b16 %v428, %v427
    %557 = vmatprep.subr.bf16.mxu0 0
    %558 = vmatpush1.bf16.msra.mxu0 %v429
    %559 = vmatprep.subr.bf16.mxu0 0
    %560 = vmatpush1.bf16.msra.mxu0 %v430
    %561 = vmatprep.subr.bf16.mxu0 0
    %562 = vmatpush1.bf16.msra.mxu0 %v431
    %563 = vmatprep.subr.bf16.mxu0 0
    %564 = vmatpush1.bf16.msra.mxu0 %v432
    %565 = vmatprep.subr.bf16.mxu0 0
    %566 = vmatpush1.bf16.msra.mxu0 %v433
    %567 = vmatprep.subr.bf16.mxu0 0
    %568 = vmatpush1.bf16.msra.mxu0 %v434
    %569 = vmatprep.subr.bf16.mxu0 0
    %570 = vmatpush1.bf16.msra.mxu0 %v435
    %571 = vmatprep.subr.bf16.mxu0 0
    %572 = vmatpush1.bf16.msra.mxu0 %v436
    %573 = vmatprep.subr.bf16.mxu0 0
    %574 = vmatpush1.bf16.msra.mxu0 %v437
    %575 = vmatprep.subr.bf16.mxu0 0
    %576 = vmatpush1.bf16.msra.mxu0 %v438
    %577 = vmatprep.subr.bf16.mxu0 0
    %578 = vmatpush1.bf16.msra.mxu0 %v439
    %579 = vmatprep.subr.bf16.mxu0 0
    %580 = vmatpush1.bf16.msra.mxu0 %v440
    %581 = vmatprep.subr.bf16.mxu0 0
    %582 = vmatpush1.bf16.msra.mxu0 %v441
    %583 = vmatprep.subr.bf16.mxu0 0
    %584 = vmatpush1.bf16.msra.mxu0 %v442
    %585 = vmatprep.subr.bf16.mxu0 0
    %586 = vmatpush1.bf16.msra.mxu0 %v443
    %587 = vmatprep.subr.bf16.mxu0 0
    %588 = vmatpush1.bf16.msra.mxu0 %v444
    %589 = vmatprep.mubr.bf16.mxu0 %v31
    %590 = vmatmul.mubr.bf16.gmra.mrb[0].mxu0 %v30
    %v591 = vpop.f32.mrb[0].mxu0
    %v592 = vadd.f32 %v171, %v591
    %v593 = vpop.f32.mrb[0].mxu0
    %v594 = vpop.f32.mrb[0].mxu0
    %v595 = vpop.f32.mrb[0].mxu0
    %596 = vdwg.mxu0
    %597 = vmatprep.subr.bf16.mxu0 0
    %598 = vmatpush1.bf16.msra.mxu0 %v445
    %599 = vmatprep.subr.bf16.mxu0 0
    %600 = vmatpush1.bf16.msra.mxu0 %v446
    %601 = vmatprep.subr.bf16.mxu0 0
    %602 = vmatpush1.bf16.msra.mxu0 %v447
    %603 = vmatprep.subr.bf16.mxu0 0
    %604 = vmatpush1.bf16.msra.mxu0 %v448
    %605 = vmatprep.subr.bf16.mxu0 0
    %606 = vmatpush1.bf16.msra.mxu0 %v449
    %607 = vmatprep.subr.bf16.mxu0 0
    %608 = vmatpush1.bf16.msra.mxu0 %v450
    %609 = vmatprep.subr.bf16.mxu0 0
    %610 = vmatpush1.bf16.msra.mxu0 %v451
    %611 = vmatprep.subr.bf16.mxu0 0
    %612 = vmatpush1.bf16.msra.mxu0 %v452
    %613 = vmatprep.subr.bf16.mxu0 0
    %614 = vmatpush1.bf16.msra.mxu0 %v453
    %615 = vmatprep.subr.bf16.mxu0 0
    %616 = vmatpush1.bf16.msra.mxu0 %v454
    %617 = vmatprep.subr.bf16.mxu0 0
    %618 = vmatpush1.bf16.msra.mxu0 %v455
    %619 = vmatprep.subr.bf16.mxu0 0
    %620 = vmatpush1.bf16.msra.mxu0 %v456
    %621 = vmatprep.subr.bf16.mxu0 0
    %622 = vmatpush1.bf16.msra.mxu0 %v457
    %623 = vmatprep.subr.bf16.mxu0 0
    %624 = vmatpush1.bf16.msra.mxu0 %v458
    %625 = vmatprep.subr.bf16.mxu0 0
    %626 = vmatpush1.bf16.msra.mxu0 %v459
    %627 = vmatprep.subr.bf16.mxu0 0
    %628 = vmatpush1.bf16.msra.mxu0 %v460
    %629 = vmatprep.mubr.bf16.mxu0 %v33
    %630 = vmatmul.mubr.bf16.gmra.mrb[0].mxu0 %v32
    %v631 = vpop.f32.mrb[0].mxu0
    %v632 = vadd.f32 %v592, %v631
    %v633 = vpop.f32.mrb[0].mxu0
    %v634 = vpop.f32.mrb[0].mxu0
    %v635 = vpop.f32.mrb[0].mxu0
    %636 = vdwg.mxu0
    %637 = vmatprep.subr.bf16.mxu0 0
    %638 = vmatpush1.bf16.msra.mxu0 %v461
    %639 = vmatprep.subr.bf16.mxu0 0
    %640 = vmatpush1.bf16.msra.mxu0 %v462
    %641 = vmatprep.subr.bf16.mxu0 0
    %642 = vmatpush1.bf16.msra.mxu0 %v463
    %643 = vmatprep.subr.bf16.mxu0 0
    %644 = vmatpush1.bf16.msra.mxu0 %v464
    %645 = vmatprep.subr.bf16.mxu0 0
    %646 = vmatpush1.bf16.msra.mxu0 %v465
    %647 = vmatprep.subr.bf16.mxu0 0
    %648 = vmatpush1.bf16.msra.mxu0 %v466
    %649 = vmatprep.subr.bf16.mxu0 0
    %650 = vmatpush1.bf16.msra.mxu0 %v467
    %651 = vmatprep.subr.bf16.mxu0 0
    %652 = vmatpush1.bf16.msra.mxu0 %v468
    %653 = vmatprep.subr.bf16.mxu0 0
    %654 = vmatpush1.bf16.msra.mxu0 %v469
    %655 = vmatprep.subr.bf16.mxu0 0
    %656 = vmatpush1.bf16.msra.mxu0 %v470
    %657 = vmatprep.subr.bf16.mxu0 0
    %658 = vmatpush1.bf16.msra.mxu0 %v471
    %659 = vmatprep.subr.bf16.mxu0 0
    %660 = vmatpush1.bf16.msra.mxu0 %v472
    %661 = vmatprep.subr.bf16.mxu0 0
    %662 = vmatpush1.bf16.msra.mxu0 %v473
    %663 = vmatprep.subr.bf16.mxu0 0
    %664 = vmatpush1.bf16.msra.mxu0 %v474
    %665 = vmatprep.subr.bf16.mxu0 0
    %666 = vmatpush1.bf16.msra.mxu0 %v475
    %667 = vmatprep.subr.bf16.mxu0 0
    %668 = vmatpush1.bf16.msra.mxu0 %v476
    %669 = vmatprep.mubr.bf16.mxu0 %v35
    %670 = vmatmul.mubr.bf16.gmra.mrb[0].mxu0 %v34
    %v671 = vpop.f32.mrb[0].mxu0
    %v672 = vadd.f32 %v632, %v671
    %v673 = vpop.f32.mrb[0].mxu0
    %v674 = vpop.f32.mrb[0].mxu0
    %v675 = vpop.f32.mrb[0].mxu0
    %676 = vdwg.mxu0
    %677 = vmatprep.subr.bf16.mxu0 0
    %678 = vmatpush1.bf16.msra.mxu0 %v477
    %679 = vmatprep.subr.bf16.mxu0 0
    %680 = vmatpush1.bf16.msra.mxu0 %v478
    %681 = vmatprep.subr.bf16.mxu0 0
    %682 = vmatpush1.bf16.msra.mxu0 %v479
    %683 = vmatprep.subr.bf16.mxu0 0
    %684 = vmatpush1.bf16.msra.mxu0 %v480
    %685 = vmatprep.subr.bf16.mxu0 0
    %686 = vmatpush1.bf16.msra.mxu0 %v481
    %687 = vmatprep.subr.bf16.mxu0 0
    %688 = vmatpush1.bf16.msra.mxu0 %v482
    %689 = vmatprep.subr.bf16.mxu0 0
    %690 = vmatpush1.bf16.msra.mxu0 %v483
    %691 = vmatprep.subr.bf16.mxu0 0
    %692 = vmatpush1.bf16.msra.mxu0 %v484
    %693 = vmatprep.subr.bf16.mxu0 0
    %694 = vmatpush1.bf16.msra.mxu0 %v485
    %695 = vmatprep.subr.bf16.mxu0 0
    %696 = vmatpush1.bf16.msra.mxu0 %v486
    %697 = vmatprep.subr.bf16.mxu0 0
    %698 = vmatpush1.bf16.msra.mxu0 %v487
    %699 = vmatprep.subr.bf16.mxu0 0
    %700 = vmatpush1.bf16.msra.mxu0 %v488
    %701 = vmatprep.subr.bf16.mxu0 0
    %702 = vmatpush1.bf16.msra.mxu0 %v489
    %703 = vmatprep.subr.bf16.mxu0 0
    %704 = vmatpush1.bf16.msra.mxu0 %v490
    %705 = vmatprep.subr.bf16.mxu0 0
    %706 = vmatpush1.bf16.msra.mxu0 %v491
    %707 = vmatprep.subr.bf16.mxu0 0
    %708 = vmatpush1.bf16.msra.mxu0 %v492
    %709 = vmatprep.mubr.bf16.mxu0 %v37
    %710 = vmatmul.mubr.bf16.gmra.mrb[0].mxu0 %v36
    %v711 = vpop.f32.mrb[0].mxu0
    %v712 = vadd.f32 %v672, %v711
    %v713 = vpop.f32.mrb[0].mxu0
    %v714 = vpop.f32.mrb[0].mxu0
    %v715 = vpop.f32.mrb[0].mxu0
    %716 = vdwg.mxu0
    %v717 = vsub.f32 0.0, %v712
    %v718 = vmul.f32 %v717, 1.442695
    %v719 = vpow.pop %v718
    %v720 = vadd.f32 %v719, 1.0
    %v721 = vrcp.pop %v720
    %v722 = vld [vmem:[%s3] sm:$0xff]
    %v723 = vld [vmem:[%s3 + $0x8] sm:$0xff]
    %v724 = vld [vmem:[%s3 + $0x10] sm:$0xff]
    %v725 = vld [vmem:[%s3 + $0x18] sm:$0xff]
    %v726 = vld [vmem:[%s3 + $0x20] sm:$0xff]
    %v727 = vld [vmem:[%s3 + $0x28] sm:$0xff]
    %v728 = vld [vmem:[%s3 + $0x30] sm:$0xff]
    %v729 = vld [vmem:[%s3 + $0x38] sm:$0xff]
    %vm730 = vcmask 523264
    %v732 = vsel %vm730, %v721, 0
    %734 = vmatprep.subr.mxu0 0.0
    %735 = vmatpush1.msra.mxu0 %v722
    %736 = vmatprep.subr.mxu0 0.0
    %737 = vmatpush1.msra.mxu0 %v723
    %738 = vmatprep.subr.mxu0 0.0
    %739 = vmatpush1.msra.mxu0 %v724
    %740 = vmatprep.subr.mxu0 0.0
    %741 = vmatpush1.msra.mxu0 %v725
    %742 = vmatprep.subr.mxu0 0.0
    %743 = vmatpush1.msra.mxu0 %v726
    %744 = vmatprep.subr.mxu0 0.0
    %745 = vmatpush1.msra.mxu0 %v727
    %746 = vmatprep.subr.mxu0 0.0
    %747 = vmatpush1.msra.mxu0 %v728
    %748 = vmatprep.subr.mxu0 0.0
    %749 = vmatpush1.msra.mxu0 %v729
    %750 = vmatprep.subr.mxu0 0.0
    %751 = vmatpush1.msra.mxu0 0.0
    %752 = vmatprep.subr.mxu0 0.0
    %753 = vmatpush1.msra.mxu0 0.0
    %754 = vmatprep.subr.mxu0 0.0
    %755 = vmatpush1.msra.mxu0 0.0
    %756 = vmatprep.subr.mxu0 0.0
    %757 = vmatpush1.msra.mxu0 0.0
    %758 = vmatprep.subr.mxu0 0.0
    %759 = vmatpush1.msra.mxu0 0.0
    %760 = vmatprep.subr.mxu0 0.0
    %761 = vmatpush1.msra.mxu0 0.0
    %762 = vmatprep.subr.mxu0 0.0
    %763 = vmatpush1.msra.mxu0 0.0
    %764 = vmatprep.subr.mxu0 0.0
    %765 = vmatpush1.msra.mxu0 0.0
    %766 = vmatprep.subr.mxu0 0.0
    %767 = vmatpush1.msra.mxu0 0.0
    %768 = vmatprep.subr.mxu0 0.0
    %769 = vmatpush1.msra.mxu0 0.0
    %770 = vmatprep.subr.mxu0 0.0
    %771 = vmatpush1.msra.mxu0 0.0
    %772 = vmatprep.subr.mxu0 0.0
    %773 = vmatpush1.msra.mxu0 0.0
    %774 = vmatprep.subr.mxu0 0.0
    %775 = vmatpush1.msra.mxu0 0.0
    %776 = vmatprep.subr.mxu0 0.0
    %777 = vmatpush1.msra.mxu0 0.0
    %778 = vmatprep.subr.mxu0 0.0
    %779 = vmatpush1.msra.mxu0 0.0
    %780 = vmatprep.subr.mxu0 0.0
    %781 = vmatpush1.msra.mxu0 0.0
    %782 = vmatprep.subr.mxu0 0.0
    %783 = vmatpush1.msra.mxu0 0.0
    %784 = vmatprep.subr.mxu0 0.0
    %785 = vmatpush1.msra.mxu0 0.0
    %786 = vmatprep.subr.mxu0 0.0
    %787 = vmatpush1.msra.mxu0 0.0
    %788 = vmatprep.subr.mxu0 0.0
    %789 = vmatpush1.msra.mxu0 0.0
    %790 = vmatprep.subr.mxu0 0.0
    %791 = vmatpush1.msra.mxu0 0.0
    %792 = vmatprep.subr.mxu0 0.0
    %793 = vmatpush1.msra.mxu0 0.0
    %794 = vmatprep.subr.mxu0 0.0
    %795 = vmatpush1.msra.mxu0 0.0
    %796 = vmatprep.subr.mxu0 0.0
    %797 = vmatpush1.msra.mxu0 0.0
    %798 = vmatprep.mubr.f32.mxu0 0.0
    %799 = vmatmul.mubr.f32.gmra.mrb[0].mxu0 %v732
    %v800 = vpop.f32.mrb[0].mxu0
    %v801 = vadd.f32 0.0, %v800
    %v802 = vpop.f32.mrb[0].mxu0
    %803 = vdwg.mxu0
    %v804 = vld [vmem:[%s4] sm:$0x1]
    %v806 = vlaneseq
    %v807 = vshrl.u32 %v806, 7
    %v808 = vsub.s32 0, %v807
    %v809 = vrot.slane %v804, %v808
    %v811 = vadd.f32 %v801, %v809
    %vm812 = vcmask 293888
    %813 = vst.msk [vmem:[#allocation2] sm:$0xff] %vm812, %v811
    // Predicated region
    $region22: #{tpu_custom_call.1} parent=1 // pred_check
      _
    $region23: #{tpu_custom_call.1} parent=1 // pred_check_branch
      %815 = sbr.rel (0) target = $region25
    $region24: #{tpu_custom_call.1} parent=1 // pred_region
      %s817 = ssub.s32 128, 128
      %818 = vsyncadd [#allocation3], %s817
      %s820 = sshll.u32 [#allocation2], 4
      %s821 = int_to_ptr.vmem [resolvable:$true] %s820
      %823 = dma.vmem_to_hbm [thread:$0]  %s821, 128, %s5, [#allocation3]
    $region25: #{tpu_custom_call.1} parent=1 // pred_fallthru
      _
    // Predicated region
    $region26: #{tpu_custom_call.1} parent=1 // pred_check
      _
    $region27: #{tpu_custom_call.1} parent=1 // pred_check_branch
      %825 = sbr.rel (0) target = $region29
    $region28: #{tpu_custom_call.1} parent=1 // pred_region
      %826 = dma.done [#allocation3], 128
    $region29: #{tpu_custom_call.1} parent=1 // pred_fallthru
      _
    %827 = vsyncpa [#allocation3], 1

</llo_original>
